<compile_context>
chip_gen: v5e
topology: v5e:2x2
jax: 0.10.0
libtpu: 0.0.40
codegen_flags: <defaults>
</compile_context>

<pallas_src>
import functools

import jax
import jax.numpy as jnp
from jax.experimental import pallas as pl
from jax.experimental.pallas import tpu as pltpu

EPS = 1e-6


def _prenorm_residual_linear_kernel(x_ref, a_ref, b_ref, w_ref, wb_ref, o_ref,
                                    ln_ref, acc_ref):
    # x_ref:  (TILE_ROWS, H)     a_ref/b_ref: (1, H)
    # w_ref:  (TK, TN)           wb_ref: (1, TN)       o_ref: (TILE_ROWS, TN)
    # ln_ref: (TILE_ROWS, H) f32 scratch   acc_ref: (TILE_ROWS, TN) f32 scratch
    n = pl.program_id(1)
    k = pl.program_id(2)
    nk = pl.num_programs(2)
    tk, tn = w_ref.shape

    # --- LayerNorm (torch semantics), computed once per row tile ------------
    @pl.when((n == 0) & (k == 0))
    def _():
        x = x_ref[...].astype(jnp.float32)
        h = x.shape[-1]
        mean = jnp.mean(x, axis=-1, keepdims=True)
        xc = x - mean
        var_unbiased = jnp.sum(xc * xc, axis=-1, keepdims=True) / (h - 1)
        d = jnp.sqrt(var_unbiased) + EPS
        inv = pl.reciprocal(d, approx=True)       # EUP slot, off the VPU path
        inv = inv * (2.0 - d * inv)                # one Newton step -> ~exact
        ln_ref[...] = (xc * inv) * a_ref[...].astype(jnp.float32) \
                      + b_ref[...].astype(jnp.float32)

    # --- K-tiled Linear on the MXU, f32 accumulation -------------------------
    @pl.when(k == 0)
    def _():
        acc_ref[...] = jnp.zeros_like(acc_ref)

    k_off = pl.multiple_of(k * tk, tk)
    ln_blk = ln_ref[:, pl.ds(k_off, tk)].astype(w_ref.dtype)
    acc_ref[...] += jnp.dot(ln_blk, w_ref[...],
                            preferred_element_type=jnp.float32)

    # --- finalize: + bias, + residual; dropout (eval mode) = identity --------
    @pl.when(k == nk - 1)
    def _():
        n_off = pl.multiple_of(n * tn, tn)
        resid = x_ref[:, pl.ds(n_off, tn)].astype(jnp.float32)
        o_ref[...] = (resid + acc_ref[...]
                      + wb_ref[...].astype(jnp.float32)).astype(o_ref.dtype)


def _sublayer_connection_linear(x2, a_2, b_2, w, wb, *, tile_rows, tn, tk,
                                vmem_limit_bytes):
    """y = x + (LayerNorm(x) @ W + b), rows already padded to tile_rows."""
    rows, H = x2.shape
    assert rows % tile_rows == 0 and H % tn == 0 and H % tk == 0
    a2 = a_2.reshape(1, H)
    b2 = b_2.reshape(1, H)
    wb2 = wb.reshape(1, H)

    grid = (rows // tile_rows, H // tn, H // tk)
    return pl.pallas_call(
        _prenorm_residual_linear_kernel,
        out_shape=jax.ShapeDtypeStruct((rows, H), x2.dtype),
        grid_spec=pltpu.PrefetchScalarGridSpec(
            num_scalar_prefetch=0,
            grid=grid,
            in_specs=[
                pl.BlockSpec((tile_rows, H), lambda r, n, k: (r, 0)),  # x rows
                pl.BlockSpec((1, H), lambda r, n, k: (0, 0)),          # a_2
                pl.BlockSpec((1, H), lambda r, n, k: (0, 0)),          # b_2
                pl.BlockSpec((tk, tn), lambda r, n, k: (k, n)),        # W tile
                pl.BlockSpec((1, tn), lambda r, n, k: (0, n)),         # bias tile
            ],
            out_specs=pl.BlockSpec((tile_rows, tn), lambda r, n, k: (r, n)),
            scratch_shapes=[
                pltpu.VMEM((tile_rows, H), jnp.float32),   # LN(x) for row tile
                pltpu.VMEM((tile_rows, tn), jnp.float32),  # matmul accumulator
            ],
        ),
        compiler_params=pltpu.CompilerParams(
            dimension_semantics=("parallel", "arbitrary", "arbitrary"),
            vmem_limit_bytes=vmem_limit_bytes,
        ),
    )(x2, a2, b2, w, wb2)


def _pick_tiles(rows, H):
    # Large MXU-friendly row tiles; fall back to a multiple of 8 for tiny demos.
    tile_rows = 256 if rows >= 256 else max(8, ((rows + 7) // 8) * 8)
    if H % 256 == 0:
        tn = tk = 256          # v6e/v7x 256-wide MXU tiles
    elif H % 128 == 0:
        tn = tk = 128
    else:
        tn = tk = H            # small / odd hidden: single full-width block
    return tile_rows, tn, tk


def _vmem_budget_bytes(tile_rows, H, tn, tk, itemsize):
    # Double-buffered inputs/outputs + f32 scratch, with headroom; capped so the
    # request stays inside v7x's 64 MiB physical VMEM.
    est = (2 * tile_rows * H + 2 * tk * tn + 2 * tile_rows * tn
           + 6 * H + 2 * tn) * itemsize
    est += (tile_rows * H + tile_rows * tn) * 4
    return int(min(max(2 * est, 32 * 1024 * 1024), 60 * 1024 * 1024))


def encoder_layer_forward(x, params):
    """EncoderLayer.forward in eval mode (dropout = identity)."""
    B, S, H = x.shape
    rows = B * S
    tile_rows, tn, tk = _pick_tiles(rows, H)
    padded_rows = pl.cdiv(rows, tile_rows) * tile_rows
    vmem_limit = _vmem_budget_bytes(tile_rows, H, tn, tk, x.dtype.itemsize)

    x2 = x.reshape(rows, H)
    if padded_rows != rows:
        x2 = jnp.pad(x2, ((0, padded_rows - rows), (0, 0)))

    run = functools.partial(_sublayer_connection_linear, tile_rows=tile_rows,
                            tn=tn, tk=tk, vmem_limit_bytes=vmem_limit)

    # sublayer[0]: residual around self_attn1(norm(x), norm(x), norm(x), mask, W_A..W_F)
    # TODO(synk): self_attn1 (with mask / W_A..W_F) is not defined in the reference
    # source; a deterministic Linear(H, H) stand-in is used.
    y = run(x2, params["a1"], params["b1"], params["w1"], params["wb1"])

    # sublayer[1]: residual around feed_forward(norm(x))
    # TODO(synk): feed_forward module is not defined in the reference source;
    # a deterministic Linear(H, H) stand-in is used.
    z = run(y, params["a2"], params["b2"], params["w2"], params["wb2"])

    return z[:rows].reshape(B, S, H)


def _reference(x, params):
    # Pure-JAX mirror of the PyTorch forward (eval mode).
    def slc(x, a, b, w, wb):
        mean = jnp.mean(x, axis=-1, keepdims=True)
        std = jnp.std(x, axis=-1, keepdims=True, ddof=1)   # torch unbiased std
        ln = a * (x - mean) / (std + EPS) + b
        return x + (ln @ w + wb)                           # dropout = identity
    xf = x.astype(jnp.float32)
    xf = slc(xf, params["a1"], params["b1"], params["w1"], params["wb1"])
    xf = slc(xf, params["a2"], params["b2"], params["w2"], params["wb2"])
    return xf.astype(x.dtype)


if __name__ == "__main__":
    B, S, H = 2, 8, 128   # lane-dense hidden (multiple of 128) per perf review
    key = jax.random.PRNGKey(0)
    kx, kw1, kb1, kw2, kb2 = jax.random.split(key, 5)

    x = jax.random.normal(kx, (B, S, H), dtype=jnp.float32)

    params = dict(
        # LayerNorm params exactly as in __init__: ones / zeros (x2 sublayers).
        a1=jnp.ones((H,), jnp.float32), b1=jnp.zeros((H,), jnp.float32),
        a2=jnp.ones((H,), jnp.float32), b2=jnp.zeros((H,), jnp.float32),
        # Deterministic Linear(H, H) stand-ins for self_attn1 / feed_forward.
        w1=jax.random.normal(kw1, (H, H), jnp.float32) / jnp.sqrt(H),
        wb1=jax.random.normal(kb1, (H,), jnp.float32) * 0.01,
        w2=jax.random.normal(kw2, (H, H), jnp.float32) / jnp.sqrt(H),
        wb2=jax.random.normal(kb2, (H,), jnp.float32) * 0.01,
    )

    out = encoder_layer_forward(x, params)
    out = jax.block_until_ready(out)

    ref = _reference(x, params)
    assert out.shape == (B, S, H)
    assert jnp.allclose(out, ref, atol=1e-3, rtol=1e-3), "mismatch vs reference"

    print("KERNEL_OK")
</pallas_src>

<mosaic_0001>
module attributes {stable_mosaic.version = 11 : i64} {
  func.func @_prenorm_residual_linear_kernel(%arg0: i32, %arg1: i32, %arg2: i32, %arg3: memref<16x128xf32, #tpu.memory_space<vmem>>, %arg4: memref<1x128xf32, #tpu.memory_space<vmem>>, %arg5: memref<1x128xf32, #tpu.memory_space<vmem>>, %arg6: memref<128x128xf32, #tpu.memory_space<vmem>>, %arg7: memref<1x128xf32, #tpu.memory_space<vmem>>, %arg8: memref<16x128xf32, #tpu.memory_space<vmem>>, %arg9: memref<16x128xf32, #tpu.memory_space<vmem>>, %arg10: memref<16x128xf32, #tpu.memory_space<vmem>>) attributes {dimension_semantics = [#tpu.dimension_semantics<parallel>, #tpu.dimension_semantics<arbitrary>, #tpu.dimension_semantics<arbitrary>], iteration_bounds = array<i64: 1, 1, 1>, scalar_prefetch = 0 : i64, scratch_operands = 2 : i64, tpu.core_type = #tpu.core_type<tc>, window_params = [{transform_indices = @transform_0, window_bounds = array<i64: 16, 128>}, {pipeline_mode = #tpu.pipeline_mode<synchronous>, transform_indices = @transform_1, window_bounds = array<i64: 1, 128>}, {pipeline_mode = #tpu.pipeline_mode<synchronous>, transform_indices = @transform_2, window_bounds = array<i64: 1, 128>}, {transform_indices = @transform_3, window_bounds = array<i64: 128, 128>}, {transform_indices = @transform_4, window_bounds = array<i64: 1, 128>}, {transform_indices = @transform_5, window_bounds = array<i64: 16, 128>}]} {
    %c0_i32 = arith.constant 0 : i32
    %0 = arith.cmpi eq, %arg1, %c0_i32 : i32
    %c0_i32_0 = arith.constant 0 : i32
    %1 = arith.cmpi eq, %arg2, %c0_i32_0 : i32
    %2 = arith.andi %0, %1 : i1
    %3 = arith.extui %2 : i1 to i32
    %c0_i32_1 = arith.constant 0 : i32
    %4 = arith.cmpi ne, %3, %c0_i32_1 : i32
    scf.if %4 {
      %c0_12 = arith.constant 0 : index
      %c0_13 = arith.constant 0 : index
      %20 = vector.load %arg3[%c0_12, %c0_13] : memref<16x128xf32, #tpu.memory_space<vmem>>, vector<16x128xf32>
      %cst_14 = arith.constant dense<0.000000e+00> : vector<16xf32>
      %21 = vector.multi_reduction <add>, %20, %cst_14 [1] : vector<16x128xf32> to vector<16xf32>
      %22 = vector.shape_cast %21 : vector<16xf32> to vector<16x1xf32>
      %cst_15 = arith.constant 1.280000e+02 : f32
      %23 = vector.broadcast %cst_15 : f32 to vector<16x1xf32>
      %24 = arith.divf %22, %23 : vector<16x1xf32>
      %25 = vector.broadcast %24 : vector<16x1xf32> to vector<16x128xf32>
      %26 = arith.subf %20, %25 : vector<16x128xf32>
      %27 = arith.mulf %26, %26 : vector<16x128xf32>
      %cst_16 = arith.constant dense<0.000000e+00> : vector<16xf32>
      %28 = vector.multi_reduction <add>, %27, %cst_16 [1] : vector<16x128xf32> to vector<16xf32>
      %29 = vector.shape_cast %28 : vector<16xf32> to vector<16x1xf32>
      %cst_17 = arith.constant 1.270000e+02 : f32
      %30 = vector.broadcast %cst_17 : f32 to vector<16x1xf32>
      %31 = arith.divf %29, %30 : vector<16x1xf32>
      %32 = math.sqrt %31 : vector<16x1xf32>
      %cst_18 = arith.constant 9.99999997E-7 : f32
      %33 = vector.broadcast %cst_18 : f32 to vector<16x1xf32>
      %34 = arith.addf %32, %33 : vector<16x1xf32>
      %35 = tpu.reciprocal %34 {approx = true} : vector<16x1xf32> -> vector<16x1xf32>
      %36 = arith.mulf %34, %35 : vector<16x1xf32>
      %cst_19 = arith.constant 2.000000e+00 : f32
      %37 = vector.broadcast %cst_19 : f32 to vector<16x1xf32>
      %38 = arith.subf %37, %36 : vector<16x1xf32>
      %39 = arith.mulf %35, %38 : vector<16x1xf32>
      %40 = vector.broadcast %39 : vector<16x1xf32> to vector<16x128xf32>
      %41 = arith.mulf %26, %40 : vector<16x128xf32>
      %c0_20 = arith.constant 0 : index
      %c0_21 = arith.constant 0 : index
      %42 = vector.load %arg4[%c0_20, %c0_21] : memref<1x128xf32, #tpu.memory_space<vmem>>, vector<1x128xf32>
      %43 = vector.broadcast %42 : vector<1x128xf32> to vector<16x128xf32>
      %44 = arith.mulf %41, %43 : vector<16x128xf32>
      %c0_22 = arith.constant 0 : index
      %c0_23 = arith.constant 0 : index
      %45 = vector.load %arg5[%c0_22, %c0_23] : memref<1x128xf32, #tpu.memory_space<vmem>>, vector<1x128xf32>
      %46 = vector.broadcast %45 : vector<1x128xf32> to vector<16x128xf32>
      %47 = arith.addf %44, %46 : vector<16x128xf32>
      %c0_24 = arith.constant 0 : index
      %c0_25 = arith.constant 0 : index
      %48 = vector.load %arg9[%c0_24, %c0_25] : memref<16x128xf32, #tpu.memory_space<vmem>>, vector<16x128xf32>
      tpu.vector_store %arg9[%c0_24, %c0_25], %47 {strides = array<i32>} : memref<16x128xf32, #tpu.memory_space<vmem>>, vector<16x128xf32>,
    } else {
    }
    %c0_i32_2 = arith.constant 0 : i32
    %5 = arith.cmpi eq, %arg2, %c0_i32_2 : i32
    %6 = arith.extui %5 : i1 to i32
    %c0_i32_3 = arith.constant 0 : i32
    %7 = arith.cmpi ne, %6, %c0_i32_3 : i32
    scf.if %7 {
      %cst_12 = arith.constant 0.000000e+00 : f32
      %20 = vector.broadcast %cst_12 : f32 to vector<16x128xf32>
      %c0_13 = arith.constant 0 : index
      %c0_14 = arith.constant 0 : index
      %21 = vector.load %arg10[%c0_13, %c0_14] : memref<16x128xf32, #tpu.memory_space<vmem>>, vector<16x128xf32>
      tpu.vector_store %arg10[%c0_13, %c0_14], %20 {strides = array<i32>} : memref<16x128xf32, #tpu.memory_space<vmem>>, vector<16x128xf32>,
    } else {
    }
    %c128_i32 = arith.constant 128 : i32
    %8 = arith.muli %arg2, %c128_i32 : i32
    %9 = tpu.assume_multiple %8, 128 : i32
    %c0 = arith.constant 0 : index
    %10 = arith.index_cast %9 : i32 to index
    %11 = vector.load %arg9[%c0, %10] : memref<16x128xf32, #tpu.memory_space<vmem>>, vector<16x128xf32>
    %c0_4 = arith.constant 0 : index
    %c0_5 = arith.constant 0 : index
    %12 = vector.load %arg10[%c0_4, %c0_5] : memref<16x128xf32, #tpu.memory_space<vmem>>, vector<16x128xf32>
    %c0_6 = arith.constant 0 : index
    %c0_7 = arith.constant 0 : index
    %13 = vector.load %arg6[%c0_6, %c0_7] : memref<128x128xf32, #tpu.memory_space<vmem>>, vector<128x128xf32>
    %cst = arith.constant dense<0.000000e+00> : vector<16x128xf32>
    %14 = tpu.matmul %11, %13, %cst {dimension_numbers = #tpu.dot_dimension_numbers<[1], [0], [0], [1], [0, 0, 1, 1], [], []>} : vector<16x128xf32>, vector<128x128xf32>, vector<16x128xf32> -> vector<16x128xf32>
    %15 = arith.addf %12, %14 : vector<16x128xf32>
    %c0_8 = arith.constant 0 : index
    %c0_9 = arith.constant 0 : index
    %16 = vector.load %arg10[%c0_8, %c0_9] : memref<16x128xf32, #tpu.memory_space<vmem>>, vector<16x128xf32>
    tpu.vector_store %arg10[%c0_8, %c0_9], %15 {strides = array<i32>} : memref<16x128xf32, #tpu.memory_space<vmem>>, vector<16x128xf32>,
    %c0_i32_10 = arith.constant 0 : i32
    %17 = arith.cmpi eq, %arg2, %c0_i32_10 : i32
    %18 = arith.extui %17 : i1 to i32
    %c0_i32_11 = arith.constant 0 : i32
    %19 = arith.cmpi ne, %18, %c0_i32_11 : i32
    scf.if %19 {
      %c128_i32_12 = arith.constant 128 : i32
      %20 = arith.muli %arg1, %c128_i32_12 : i32
      %21 = tpu.assume_multiple %20, 128 : i32
      %c0_13 = arith.constant 0 : index
      %22 = arith.index_cast %21 : i32 to index
      %23 = vector.load %arg3[%c0_13, %22] : memref<16x128xf32, #tpu.memory_space<vmem>>, vector<16x128xf32>
      %c0_14 = arith.constant 0 : index
      %c0_15 = arith.constant 0 : index
      %24 = vector.load %arg10[%c0_14, %c0_15] : memref<16x128xf32, #tpu.memory_space<vmem>>, vector<16x128xf32>
      %25 = arith.addf %23, %24 : vector<16x128xf32>
      %c0_16 = arith.constant 0 : index
      %c0_17 = arith.constant 0 : index
      %26 = vector.load %arg7[%c0_16, %c0_17] : memref<1x128xf32, #tpu.memory_space<vmem>>, vector<1x128xf32>
      %27 = vector.broadcast %26 : vector<1x128xf32> to vector<16x128xf32>
      %28 = arith.addf %25, %27 : vector<16x128xf32>
      %c0_18 = arith.constant 0 : index
      %c0_19 = arith.constant 0 : index
      %29 = vector.load %arg8[%c0_18, %c0_19] : memref<16x128xf32, #tpu.memory_space<vmem>>, vector<16x128xf32>
      tpu.vector_store %arg8[%c0_18, %c0_19], %28 {strides = array<i32>} : memref<16x128xf32, #tpu.memory_space<vmem>>, vector<16x128xf32>,
    } else {
    }
    return
  }
  func.func @transform_0(%arg0: i32, %arg1: i32, %arg2: i32) -> (i32, i32) {
    %c0_i32 = arith.constant 0 : i32
    %c0_i32_0 = arith.constant 0 : i32
    return %arg0, %c0_i32 : i32, i32
  }
  func.func @transform_1(%arg0: i32, %arg1: i32, %arg2: i32) -> (i32, i32) {
    %c0_i32 = arith.constant 0 : i32
    %c0_i32_0 = arith.constant 0 : i32
    %c0_i32_1 = arith.constant 0 : i32
    return %c0_i32, %c0_i32_0 : i32, i32
  }
  func.func @transform_2(%arg0: i32, %arg1: i32, %arg2: i32) -> (i32, i32) {
    %c0_i32 = arith.constant 0 : i32
    %c0_i32_0 = arith.constant 0 : i32
    %c0_i32_1 = arith.constant 0 : i32
    return %c0_i32, %c0_i32_0 : i32, i32
  }
  func.func @transform_3(%arg0: i32, %arg1: i32, %arg2: i32) -> (i32, i32) {
    %c0_i32 = arith.constant 0 : i32
    return %arg2, %arg1 : i32, i32
  }
  func.func @transform_4(%arg0: i32, %arg1: i32, %arg2: i32) -> (i32, i32) {
    %c0_i32 = arith.constant 0 : i32
    %c0_i32_0 = arith.constant 0 : i32
    return %c0_i32, %arg1 : i32, i32
  }
  func.func @transform_5(%arg0: i32, %arg1: i32, %arg2: i32) -> (i32, i32) {
    %c0_i32 = arith.constant 0 : i32
    return %arg0, %arg1 : i32, i32
  }
}

</mosaic_0001>

<llo_original>
// kernel: tpu_custom_call.1
$region0: #{tpu_custom_call.1}
  #allocation0 [shape = 'u32[]', space=smem, size = 0x4, offset = 0x4, fixed_abs, tag = 'smem constant byte address 0x4 - core index']
  #allocation1 [shape = 'u32[72,128]{1,0:T(1,128)}', space=vmem, size = 0x9000, scoped, tag = 'internal scratch']
  #allocation2 [shape = 'f32[16,128]{1,0:T(8,128)}', space=vmem, size = 0x2000, scoped, tag = 'scratch operand']
  #allocation3 [shape = 'f32[16,128]{1,0:T(8,128)}', space=vmem, size = 0x2000, scoped, tag = 'scratch operand']
  %s0 = inlined_call_operand.hbm [shape: f32[16,128], index: 0, kind: input, shape index: {}]
  %s1 = inlined_call_operand.hbm [shape: f32[1,128], index: 1, kind: input, shape index: {}]
  %s2 = inlined_call_operand.vmem [shape: f32[1,128], index: 2, kind: input, shape index: {}]
  %s3 = inlined_call_operand.hbm [shape: f32[128,128], index: 3, kind: input, shape index: {}]
  %s4 = inlined_call_operand.vmem [shape: f32[1,128], index: 4, kind: input, shape index: {}]
  %s5 = inlined_call_operand.hbm [shape: f32[16,128], index: 5, kind: output, shape index: {}]
  %s6 = sld [smem:[#allocation0]]
  $region54: #{tpu_custom_call.1} parent=0
    _
  %s8 = ssub.s32 1, %s6
  %s9 = scalar_select 0, %s8, %s6
  $region1: #{tpu_custom_call.1} parent=0
    #allocation4 [shape = 'u8[8192]{0}', space=vmem, size = 0x2000, scoped, tag = 'input window, operand 0, single buffered']
    #allocation5 [shape = 's32[1]{0}', space=sflag, size = 0x4, scoped, tag = 'scoped memory for tpu_custom_call.1']
    #allocation6 [shape = 's32[1]{0}', space=sflag, size = 0x4, scoped, tag = 'scoped memory for tpu_custom_call.1']
    #allocation7 [shape = 'u8[512]{0}', space=vmem, size = 0x400, scoped, tag = 'input window, operand 1, single buffered']
    #allocation8 [shape = 's32[1]{0}', space=sflag, size = 0x4, scoped, tag = 'scoped memory for tpu_custom_call.1']
    #allocation9 [shape = 'u8[65536]{0}', space=vmem, size = 0x10000, scoped, tag = 'input window, operand 3, single buffered']
    #allocation10 [shape = 'u8[8192]{0}', space=vmem, size = 0x2000, scoped, tag = 'output window, operand 0, single buffered']
    %10 = vsyncpa [#allocation5], 0
    %11 = vsyncpa [#allocation8], 0
    %12 = vsyncpa [#allocation6], 0
    // Predicated region
    $region2: #{tpu_custom_call.1} parent=1 // pred_check
      _
    $region3: #{tpu_custom_call.1} parent=1 // pred_check_branch
      %14 = sbr.rel (0) target = $region5
    $region4: #{tpu_custom_call.1} parent=1 // pred_region
      %16 = vsyncadd [#allocation5], 0
      %s17 = sshll.u32 %s0, 4
      %s18 = int_to_ptr.hbm [resolvable:$true] %s17
      %s19 = sshll.u32 [#allocation4], 4
      %s20 = int_to_ptr.vmem [resolvable:$true] %s19
      %25 = dma.hbm_to_vmem [thread:$0]  %s18, 256, %s20, [#allocation5], 128, 128, 8
    $region5: #{tpu_custom_call.1} parent=1 // pred_fallthru
      _
    // Predicated region
    $region6: #{tpu_custom_call.1} parent=1 // pred_check
      _
    $region7: #{tpu_custom_call.1} parent=1 // pred_check_branch
      %27 = sbr.rel (0) target = $region9
    $region8: #{tpu_custom_call.1} parent=1 // pred_region
      %29 = vsyncadd [#allocation8], 0
      %s31 = sshll.u32 %s1, 4
      %s32 = int_to_ptr.hbm [resolvable:$true] %s31
      %s33 = sshll.u32 [#allocation7], 4
      %s34 = int_to_ptr.vmem [resolvable:$true] %s33
      %36 = dma.hbm_to_vmem [thread:$0]  %s32, 16, %s34, [#allocation8]
    $region9: #{tpu_custom_call.1} parent=1 // pred_fallthru
      _
    // Predicated region
    $region10: #{tpu_custom_call.1} parent=1 // pred_check
      _
    $region11: #{tpu_custom_call.1} parent=1 // pred_check_branch
      %38 = sbr.rel (0) target = $region13
    $region12: #{tpu_custom_call.1} parent=1 // pred_region
      _
    $region13: #{tpu_custom_call.1} parent=1 // pred_fallthru
      _
    // Predicated region
    $region14: #{tpu_custom_call.1} parent=1 // pred_check
      _
    $region15: #{tpu_custom_call.1} parent=1 // pred_check_branch
      %40 = sbr.rel (0) target = $region17
    $region16: #{tpu_custom_call.1} parent=1 // pred_region
      %42 = vsyncadd [#allocation8], 0
      %s43 = sshll.u32 %s3, 4
      %s44 = int_to_ptr.hbm [resolvable:$true] %s43
      %s45 = sshll.u32 [#allocation9], 4
      %s46 = int_to_ptr.vmem [resolvable:$true] %s45
      %51 = dma.hbm_to_vmem [thread:$0]  %s44, 2048, %s46, [#allocation8], 128, 128, 8
    $region17: #{tpu_custom_call.1} parent=1 // pred_fallthru
      _
    // Predicated region
    $region18: #{tpu_custom_call.1} parent=1 // pred_check
      _
    $region19: #{tpu_custom_call.1} parent=1 // pred_check_branch
      %53 = sbr.rel (0) target = $region21
    $region20: #{tpu_custom_call.1} parent=1 // pred_region
      _
    $region21: #{tpu_custom_call.1} parent=1 // pred_fallthru
      _
    // Predicated region
    $region22: #{tpu_custom_call.1} parent=1 // pred_check
      _
    $region23: #{tpu_custom_call.1} parent=1 // pred_check_branch
      %55 = sbr.rel (0) target = $region25
    $region24: #{tpu_custom_call.1} parent=1 // pred_region
      %57 = dma.done [#allocation5], 256
    $region25: #{tpu_custom_call.1} parent=1 // pred_fallthru
      _
    // Predicated region
    $region26: #{tpu_custom_call.1} parent=1 // pred_check
      _
    $region27: #{tpu_custom_call.1} parent=1 // pred_check_branch
      %59 = sbr.rel (0) target = $region29
    $region28: #{tpu_custom_call.1} parent=1 // pred_region
      %61 = dma.done [#allocation8], 16
    $region29: #{tpu_custom_call.1} parent=1 // pred_fallthru
      _
    // Predicated region
    $region30: #{tpu_custom_call.1} parent=1 // pred_check
      _
    $region31: #{tpu_custom_call.1} parent=1 // pred_check_branch
      %63 = sbr.rel (0) target = $region33
    $region32: #{tpu_custom_call.1} parent=1 // pred_region
      %65 = dma.done [#allocation8], 2048
    $region33: #{tpu_custom_call.1} parent=1 // pred_fallthru
      _
    %p66 = scmp.eq.s32.totalorder 0, 0
    %p67 = scmp.eq.s32.totalorder 0, 0
    %p68 = pnand %p66, %p67
    %p69 = pneg %p68
    // Predicated region
    $region34: #{tpu_custom_call.1} parent=1 // pred_check
      _
    $region35: #{tpu_custom_call.1} parent=1 // pred_check_branch
      %71 = sbr.rel (%p68) target = $region37
    $region36: #{tpu_custom_call.1} parent=1 // pred_region
      %v72 = vld [vmem:[#allocation4] sm:$0xff]
      %v73 = vld [vmem:[#allocation4 + $0x8] sm:$0xff]
      %74 = vadd.xlane.f32.xlu0 %v72
      %v75 = vpop.xlane.xlu0 %74
      %76 = vadd.xlane.f32.xlu0 %v73
      %v77 = vpop.xlane.xlu0 %76
      %v78 = vrcp.pop 128.0
      %v79 = vmul.f32 128.0, %v78
      %v80 = vsub.f32 1.0, %v79
      %v81 = vmul.f32 %v78, %v80
      %v82 = vadd.f32 %v78, %v81
      %vm83 = vweird.f32 %v78
      %v84 = vsel %vm83, %v78, %v82
      %v85 = vmul.f32 %v75, %v84
      %v86 = vmul.f32 %v77, %v84
      %v87 = vsub.f32 %v72, %v85
      %v88 = vsub.f32 %v73, %v86
      %v89 = vmul.f32 %v87, %v87
      %v90 = vmul.f32 %v88, %v88
      %91 = vadd.xlane.f32.xlu0 %v89
      %v92 = vpop.xlane.xlu0 %91
      %93 = vadd.xlane.f32.xlu0 %v90
      %v94 = vpop.xlane.xlu0 %93
      %v95 = vrcp.pop 127.0
      %v96 = vmul.f32 127.0, %v95
      %v97 = vsub.f32 1.0, %v96
      %v98 = vmul.f32 %v95, %v97
      %v99 = vadd.f32 %v95, %v98
      %vm100 = vweird.f32 %v95
      %v101 = vsel %vm100, %v95, %v99
      %v102 = vmul.f32 %v92, %v101
      %v103 = vmul.f32 %v94, %v101
      %v104 = vrsqrt.pop %v102
      %v105 = vmul.f32 %v104, %v102
      %v106 = vmul.f32 %v105, %v104
      %v107 = vmul.f32 0.5, %v106
      %v108 = vsub.f32 1.5, %v107
      %v109 = vmul.f32 %v104, %v108
      %v110 = vmul.f32 %v102, %v109
      %vm111 = vcmp.eq.f32.partialorder %v102, inf
      %v112 = vsel %vm111, %v102, %v110
      %vm113 = vcmp.eq.f32.partialorder %v102, 0.0
      %v114 = vand.u32 %v102, 2147483648
      %v115 = vsel %vm113, %v114, %v112
      %v116 = vrsqrt.pop %v103
      %v117 = vmul.f32 %v116, %v103
      %v118 = vmul.f32 %v117, %v116
      %v119 = vmul.f32 0.5, %v118
      %v120 = vsub.f32 1.5, %v119
      %v121 = vmul.f32 %v116, %v120
      %v122 = vmul.f32 %v103, %v121
      %vm123 = vcmp.eq.f32.partialorder %v103, inf
      %v124 = vsel %vm123, %v103, %v122
      %vm125 = vcmp.eq.f32.partialorder %v103, 0.0
      %v126 = vand.u32 %v103, 2147483648
      %v127 = vsel %vm125, %v126, %v124
      %v128 = vadd.f32 %v115, 1e-06
      %v129 = vadd.f32 %v127, 1e-06
      %v130 = vrcp.pop %v128
      %v131 = vrcp.pop %v129
      %v132 = vmul.f32 %v128, %v130
      %v133 = vmul.f32 %v129, %v131
      %v134 = vsub.f32 2.0, %v132
      %v135 = vsub.f32 2.0, %v133
      %v136 = vmul.f32 %v130, %v134
      %v137 = vmul.f32 %v131, %v135
      %v138 = vmul.f32 %v87, %v136
      %v139 = vmul.f32 %v88, %v137
      %v140 = vld [vmem:[#allocation7] sm:$0x1]
      %v142 = vperm.slane %v140, 0
      %v144 = vmul.f32 %v138, %v142
      %v145 = vmul.f32 %v139, %v142
      %v146 = vld [vmem:[%s2] sm:$0x1]
      %v148 = vperm.slane %v146, 0
      %v150 = vadd.f32 %v144, %v148
      %v151 = vadd.f32 %v145, %v148
      %152 = vst [vmem:[#allocation2] sm:$0xff] %v150
      %153 = vst [vmem:[#allocation2 + $0x8] sm:$0xff] %v151
    $region37: #{tpu_custom_call.1} parent=1 // pred_fallthru
      _
    // Predicated region
    $region38: #{tpu_custom_call.1} parent=1 // pred_check
      %p154 = pneg %p67
    $region39: #{tpu_custom_call.1} parent=1 // pred_check_branch
      %156 = sbr.rel (%p154) target = $region41
    $region40: #{tpu_custom_call.1} parent=1 // pred_region
      %157 = vst [vmem:[#allocation3] sm:$0xff] 0.0
      %158 = vst [vmem:[#allocation3 + $0x8] sm:$0xff] 0.0
    $region41: #{tpu_custom_call.1} parent=1 // pred_fallthru
      _
    %s159 = smul.u32 0, 128
    %s160 = sshra.s32 %s159, 7
    %s161 = sand.u32 %s159, 127
    %s162 = scalar_lea.vmem [#allocation2], %s160
    %v163 = vld [vmem:[%s162] sm:$0xff]
    %v164 = vld [vmem:[%s162 + $0x8] sm:$0xff]
    %v165 = vld [vmem:[#allocation3] sm:$0xff]
    %v166 = vld [vmem:[#allocation3 + $0x8] sm:$0xff]
    %v167 = vld [vmem:[#allocation9] sm:$0xff]
    %v168 = vld [vmem:[#allocation9 + $0x8] sm:$0xff]
    %v169 = vld [vmem:[#allocation9 + $0x10] sm:$0xff]
    %v170 = vld [vmem:[#allocation9 + $0x18] sm:$0xff]
    %v171 = vld [vmem:[#allocation9 + $0x20] sm:$0xff]
    %v172 = vld [vmem:[#allocation9 + $0x28] sm:$0xff]
    %v173 = vld [vmem:[#allocation9 + $0x30] sm:$0xff]
    %v174 = vld [vmem:[#allocation9 + $0x38] sm:$0xff]
    %v175 = vld [vmem:[#allocation9 + $0x40] sm:$0xff]
    %v176 = vld [vmem:[#allocation9 + $0x48] sm:$0xff]
    %v177 = vld [vmem:[#allocation9 + $0x50] sm:$0xff]
    %v178 = vld [vmem:[#allocation9 + $0x58] sm:$0xff]
    %v179 = vld [vmem:[#allocation9 + $0x60] sm:$0xff]
    %v180 = vld [vmem:[#allocation9 + $0x68] sm:$0xff]
    %v181 = vld [vmem:[#allocation9 + $0x70] sm:$0xff]
    %v182 = vld [vmem:[#allocation9 + $0x78] sm:$0xff]
    %183 = vmatpush.msra.mxu0 %v182
    %184 = vmatpush.msra.mxu0 %v181
    %185 = vmatpush.msra.mxu0 %v180
    %186 = vmatpush.msra.mxu0 %v179
    %187 = vmatpush.msra.mxu0 %v178
    %188 = vmatpush.msra.mxu0 %v177
    %189 = vmatpush.msra.mxu0 %v176
    %190 = vmatpush.msra.mxu0 %v175
    %191 = vmatpush.msra.mxu0 %v174
    %192 = vmatpush.msra.mxu0 %v173
    %193 = vmatpush.msra.mxu0 %v172
    %194 = vmatpush.msra.mxu0 %v171
    %195 = vmatpush.msra.mxu0 %v170
    %196 = vmatpush.msra.mxu0 %v169
    %197 = vmatpush.msra.mxu0 %v168
    %198 = vmatpush.msra.mxu0 %v167
    %199 = vmatmul.f32.gmra.mxu0 %v163
    %v200 = vpop.f32.mrf.mxu0
    %v201 = vadd.f32 0.0, %v200
    %202 = vmatmul.f32.gmra.mxu0 %v164
    %v203 = vpop.f32.mrf.mxu0
    %v204 = vadd.f32 0.0, %v203
    %205 = vdwg.mxu0
    %v206 = vadd.f32 %v165, %v201
    %v207 = vadd.f32 %v166, %v204
    %208 = vst [vmem:[#allocation3] sm:$0xff] %v206
    %209 = vst [vmem:[#allocation3 + $0x8] sm:$0xff] %v207
    // Predicated region
    $region42: #{tpu_custom_call.1} parent=1 // pred_check
      %p210 = pneg %p67
    $region43: #{tpu_custom_call.1} parent=1 // pred_check_branch
      %212 = sbr.rel (%p210) target = $region45
    $region44: #{tpu_custom_call.1} parent=1 // pred_region
      %s213 = smul.u32 0, 128
      %s214 = sshra.s32 %s213, 7
      %s215 = sand.u32 %s213, 127
      %s216 = scalar_lea.vmem [#allocation4], %s214
      %v217 = vld [vmem:[%s216] sm:$0xff]
      %v218 = vld [vmem:[%s216 + $0x8] sm:$0xff]
      %v219 = vld [vmem:[#allocation3] sm:$0xff]
      %v220 = vld [vmem:[#allocation3 + $0x8] sm:$0xff]
      %v221 = vadd.f32 %v217, %v219
      %v222 = vadd.f32 %v218, %v220
      %v223 = vld [vmem:[%s4] sm:$0x1]
      %v225 = vperm.slane %v223, 0
      %v227 = vadd.f32 %v221, %v225
      %v228 = vadd.f32 %v222, %v225
      %229 = vst [vmem:[#allocation10] sm:$0xff] %v227
      %230 = vst [vmem:[#allocation10 + $0x8] sm:$0xff] %v228
    $region45: #{tpu_custom_call.1} parent=1 // pred_fallthru
      _
    // Predicated region
    $region46: #{tpu_custom_call.1} parent=1 // pred_check
      _
    $region47: #{tpu_custom_call.1} parent=1 // pred_check_branch
      %232 = sbr.rel (0) target = $region49
    $region48: #{tpu_custom_call.1} parent=1 // pred_region
      %234 = vsyncadd [#allocation6], 0
      %s235 = sshll.u32 [#allocation10], 4
      %s236 = int_to_ptr.vmem [resolvable:$true] %s235
      %s237 = sshll.u32 %s5, 4
      %s238 = int_to_ptr.hbm [resolvable:$true] %s237
      %243 = dma.vmem_to_hbm [thread:$0]  %s236, 256, %s238, [#allocation6], 128, 128, 8
    $region49: #{tpu_custom_call.1} parent=1 // pred_fallthru
      _
    // Predicated region
    $region50: #{tpu_custom_call.1} parent=1 // pred_check
      _
    $region51: #{tpu_custom_call.1} parent=1 // pred_check_branch
      %245 = sbr.rel (0) target = $region53
    $region52: #{tpu_custom_call.1} parent=1 // pred_region
      %247 = dma.done [#allocation6], 256
    $region53: #{tpu_custom_call.1} parent=1 // pred_fallthru
      _
    %248 = vsyncpa [#allocation5], 1
    %249 = vsyncpa [#allocation8], 1
    %250 = vsyncpa [#allocation6], 1

</llo_original>
